<compile_context>
chip_gen: v5e
topology: v5e:2x2
jax: 0.10.0
libtpu: 0.0.40
codegen_flags: <defaults>
</compile_context>

<pallas_src>
import jax
import jax.numpy as jnp
from jax.experimental import pallas as pl
from jax.experimental.pallas import tpu as pltpu

# ---- model dimensions (small, deterministic) --------------------------------
B = 16        # batch
D_IN = 32     # input features
H1 = 64       # pretrained hidden 1
H2 = 64       # pretrained hidden 2 (= flattened feature width)
H3 = 32       # new_model hidden
OUT = 1       # regression output
LANE = 64     # common packed lane width (max of H1, H2, H3)

W_ROWS = D_IN + H1 + H2       # 160 rows in the packed bf16 weight slab
VEC_ROWS = 8                  # bias/w4 slab, padded to a full sublane tile

# advisory cost estimate (3 MXU matmuls + a VPU final layer; bytes = operands)
_FLOPS = 2 * B * (D_IN * H1 + H1 * H2 + H2 * H3 + H3 * OUT)
_BYTES = (B * D_IN * 4) + (W_ROWS * LANE * 2) + (VEC_ROWS * LANE * 4) + (B * OUT * 4)


def append_model_kernel(x_ref, w_ref, vec_ref, o_ref):
    # x arrives f32 (PyTorch semantics); cast once to bf16 for the MXU.
    x = x_ref[...].astype(jnp.bfloat16)               # (B, D_IN)
    vec = vec_ref[...]                                 # (8, 64)  f32

    # Slice the bf16 weight slab directly -- no f32 widening of the slab.
    w1 = w_ref[0:D_IN, :]                              # (32, 64) bf16
    w2 = w_ref[D_IN:D_IN + H1, :]                      # (64, 64) bf16
    w3 = w_ref[D_IN + H1:W_ROWS, :]                    # (64, 64) bf16, cols >= H3 are 0

    b1 = vec[0:1, :]                                   # (1, 64)
    b2 = vec[1:2, :]                                   # (1, 64)
    b3 = vec[2:3, :]                                   # (1, 64), cols >= H3 are 0
    w4_row = vec[3:4, :]                               # (1, 64), cols >= H3 are 0
    b4 = vec[4:5, 0:1]                                 # (1, 1)

    # --- frozen pretrained_model(x): Linear -> ReLU -> Linear -> ReLU ---
    # bf16 x bf16 -> f32 accumulation (single-pass native MXU path).
    h = jnp.maximum(
        jnp.dot(x, w1, preferred_element_type=jnp.float32) + b1, 0.0)
    feat = jnp.maximum(
        jnp.dot(h.astype(jnp.bfloat16), w2,
                preferred_element_type=jnp.float32) + b2, 0.0)

    # --- x = x.view(x.size(0), -1): identity, features already (B, H2) ---

    # --- new_model(feat): Linear -> ReLU -> Linear(H3, 1) ---
    h3 = jnp.maximum(
        jnp.dot(feat.astype(jnp.bfloat16), w3,
                preferred_element_type=jnp.float32) + b3, 0.0)
    # Final N=1 layer as elementwise multiply + lane reduction (VPU + XLU);
    # padded columns of h3 / w4_row are exactly zero, so the sum is exact.
    y = jnp.sum(h3 * w4_row, axis=-1, keepdims=True) + b4
    o_ref[...] = y.astype(o_ref.dtype)


def append_model_forward(x, w_slab, vec_slab):
    return pl.pallas_call(
        append_model_kernel,
        out_shape=jax.ShapeDtypeStruct((B, OUT), jnp.float32),
        # No grid: single invocation, whole arrays resident in VMEM.
        in_specs=[
            pl.BlockSpec(memory_space=pltpu.MemorySpace.VMEM),   # x
            pl.BlockSpec(memory_space=pltpu.MemorySpace.VMEM),   # packed bf16 weights
            pl.BlockSpec(memory_space=pltpu.MemorySpace.VMEM),   # biases + w4 + b4
        ],
        out_specs=pl.BlockSpec(memory_space=pltpu.MemorySpace.VMEM),
        cost_estimate=pl.CostEstimate(
            flops=_FLOPS, transcendentals=0, bytes_accessed=_BYTES),
    )(x, w_slab, vec_slab)


def pack_params(params):
    """Pack the 8 parameter tensors into 2 slabs (one bf16, one f32)."""
    w1, b1, w2, b2, w3, b3, w4, b4 = params
    w3p = jnp.zeros((H2, LANE), jnp.float32).at[:, :H3].set(w3)
    w_slab = jnp.concatenate([w1, w2, w3p], axis=0).astype(jnp.bfloat16)
    vec = jnp.zeros((VEC_ROWS, LANE), jnp.float32)
    vec = vec.at[0, :H1].set(b1[0])
    vec = vec.at[1, :H2].set(b2[0])
    vec = vec.at[2, :H3].set(b3[0])
    vec = vec.at[3, :H3].set(w4[:, 0])
    vec = vec.at[4, 0].set(b4[0, 0])
    return w_slab, vec


def reference_forward(x, params):
    """Pure-JAX reference mirroring the kernel's bf16 weight/activation rounding."""
    w1, b1, w2, b2, w3, b3, w4, b4 = params
    bf = lambda a: a.astype(jnp.bfloat16)
    h = jnp.maximum(
        jnp.dot(bf(x), bf(w1), preferred_element_type=jnp.float32) + b1, 0.0)
    feat = jnp.maximum(
        jnp.dot(bf(h), bf(w2), preferred_element_type=jnp.float32) + b2, 0.0)
    feat = feat.reshape(feat.shape[0], -1)             # x.view(B, -1)
    h3 = jnp.maximum(
        jnp.dot(bf(feat), bf(w3), preferred_element_type=jnp.float32) + b3, 0.0)
    return h3 @ w4 + b4                                 # head w4/b4 stay f32


def init_params(key):
    ks = jax.random.split(key, 8)

    def lin(kw, kb, fan_in, fan_out):
        w = jax.random.normal(kw, (fan_in, fan_out), jnp.float32) * (1.0 / jnp.sqrt(fan_in))
        b = jax.random.normal(kb, (1, fan_out), jnp.float32) * 0.01
        return w, b

    w1, b1 = lin(ks[0], ks[1], D_IN, H1)
    w2, b2 = lin(ks[2], ks[3], H1, H2)
    w3, b3 = lin(ks[4], ks[5], H2, H3)
    w4, b4 = lin(ks[6], ks[7], H3, OUT)
    return (w1, b1, w2, b2, w3, b3, w4, b4)


if __name__ == "__main__":
    key = jax.random.PRNGKey(0)
    kx, kp = jax.random.split(key)
    x = jax.random.normal(kx, (B, D_IN), jnp.float32)
    params = init_params(kp)
    w_slab, vec_slab = pack_params(params)

    out = append_model_forward(x, w_slab, vec_slab)
    out = jax.block_until_ready(out)

    ref = reference_forward(x, params)
    assert out.shape == (B, OUT)
    # bf16 activations on the MXU path: compare at ~1e-2 tolerance.
    assert jnp.allclose(out, ref, atol=1e-2, rtol=1e-2), "mismatch vs reference"

    print("KERNEL_OK")
</pallas_src>

<mosaic_0001>
module attributes {stable_mosaic.version = 11 : i64} {
  func.func @append_model_kernel(%arg0: memref<16x32xf32, #tpu.memory_space<vmem>>, %arg1: memref<160x64xbf16, #tpu.memory_space<vmem>>, %arg2: memref<8x64xf32, #tpu.memory_space<vmem>>, %arg3: memref<16x1xf32, #tpu.memory_space<vmem>>) attributes {dimension_semantics = [], scalar_prefetch = 0 : i64, scratch_operands = 0 : i64, tpu.core_type = #tpu.core_type<tc>} {
    %c0 = arith.constant 0 : index
    %c0_0 = arith.constant 0 : index
    %0 = vector.load %arg0[%c0, %c0_0] : memref<16x32xf32, #tpu.memory_space<vmem>>, vector<16x32xf32>
    %1 = arith.truncf %0 : vector<16x32xf32> to vector<16x32xbf16>
    %c0_1 = arith.constant 0 : index
    %c0_2 = arith.constant 0 : index
    %2 = vector.load %arg2[%c0_1, %c0_2] : memref<8x64xf32, #tpu.memory_space<vmem>>, vector<8x64xf32>
    %c0_3 = arith.constant 0 : index
    %c0_4 = arith.constant 0 : index
    %3 = vector.load %arg1[%c0_3, %c0_4] : memref<160x64xbf16, #tpu.memory_space<vmem>>, vector<32x64xbf16>
    %c32 = arith.constant 32 : index
    %c0_5 = arith.constant 0 : index
    %4 = vector.load %arg1[%c32, %c0_5] : memref<160x64xbf16, #tpu.memory_space<vmem>>, vector<64x64xbf16>
    %c96 = arith.constant 96 : index
    %c0_6 = arith.constant 0 : index
    %5 = vector.load %arg1[%c96, %c0_6] : memref<160x64xbf16, #tpu.memory_space<vmem>>, vector<64x64xbf16>
    %6 = vector.extract_strided_slice %2 {offsets = [0, 0], sizes = [1, 64], strides = [1, 1]} : vector<8x64xf32> to vector<1x64xf32>
    %7 = vector.extract_strided_slice %2 {offsets = [1, 0], sizes = [1, 64], strides = [1, 1]} : vector<8x64xf32> to vector<1x64xf32>
    %8 = vector.extract_strided_slice %2 {offsets = [2, 0], sizes = [1, 64], strides = [1, 1]} : vector<8x64xf32> to vector<1x64xf32>
    %9 = vector.extract_strided_slice %2 {offsets = [3, 0], sizes = [1, 64], strides = [1, 1]} : vector<8x64xf32> to vector<1x64xf32>
    %10 = vector.extract_strided_slice %2 {offsets = [4, 0], sizes = [1, 1], strides = [1, 1]} : vector<8x64xf32> to vector<1x1xf32>
    %cst = arith.constant dense<0.000000e+00> : vector<16x64xf32>
    %11 = tpu.matmul %1, %3, %cst {dimension_numbers = #tpu.dot_dimension_numbers<[1], [0], [0], [1], [0, 0, 1, 1], [], []>} : vector<16x32xbf16>, vector<32x64xbf16>, vector<16x64xf32> -> vector<16x64xf32>
    %12 = vector.broadcast %6 : vector<1x64xf32> to vector<16x64xf32>
    %13 = arith.addf %11, %12 : vector<16x64xf32>
    %cst_7 = arith.constant 0.000000e+00 : f32
    %14 = vector.broadcast %cst_7 : f32 to vector<16x64xf32>
    %15 = arith.maximumf %13, %14 : vector<16x64xf32>
    %16 = arith.truncf %15 : vector<16x64xf32> to vector<16x64xbf16>
    %cst_8 = arith.constant dense<0.000000e+00> : vector<16x64xf32>
    %17 = tpu.matmul %16, %4, %cst_8 {dimension_numbers = #tpu.dot_dimension_numbers<[1], [0], [0], [1], [0, 0, 1, 1], [], []>} : vector<16x64xbf16>, vector<64x64xbf16>, vector<16x64xf32> -> vector<16x64xf32>
    %18 = vector.broadcast %7 : vector<1x64xf32> to vector<16x64xf32>
    %19 = arith.addf %17, %18 : vector<16x64xf32>
    %cst_9 = arith.constant 0.000000e+00 : f32
    %20 = vector.broadcast %cst_9 : f32 to vector<16x64xf32>
    %21 = arith.maximumf %19, %20 : vector<16x64xf32>
    %22 = arith.truncf %21 : vector<16x64xf32> to vector<16x64xbf16>
    %cst_10 = arith.constant dense<0.000000e+00> : vector<16x64xf32>
    %23 = tpu.matmul %22, %5, %cst_10 {dimension_numbers = #tpu.dot_dimension_numbers<[1], [0], [0], [1], [0, 0, 1, 1], [], []>} : vector<16x64xbf16>, vector<64x64xbf16>, vector<16x64xf32> -> vector<16x64xf32>
    %24 = vector.broadcast %8 : vector<1x64xf32> to vector<16x64xf32>
    %25 = arith.addf %23, %24 : vector<16x64xf32>
    %cst_11 = arith.constant 0.000000e+00 : f32
    %26 = vector.broadcast %cst_11 : f32 to vector<16x64xf32>
    %27 = arith.maximumf %25, %26 : vector<16x64xf32>
    %28 = vector.broadcast %9 : vector<1x64xf32> to vector<16x64xf32>
    %29 = arith.mulf %27, %28 : vector<16x64xf32>
    %cst_12 = arith.constant dense<0.000000e+00> : vector<16xf32>
    %30 = vector.multi_reduction <add>, %29, %cst_12 [1] : vector<16x64xf32> to vector<16xf32>
    %31 = vector.shape_cast %30 : vector<16xf32> to vector<16x1xf32>
    %32 = vector.broadcast %10 : vector<1x1xf32> to vector<16x1xf32>
    %33 = arith.addf %31, %32 : vector<16x1xf32>
    %c0_13 = arith.constant 0 : index
    %c0_14 = arith.constant 0 : index
    %34 = vector.load %arg3[%c0_13, %c0_14] : memref<16x1xf32, #tpu.memory_space<vmem>>, vector<16x1xf32>
    tpu.vector_store %arg3[%c0_13, %c0_14], %33 {strides = array<i32>} : memref<16x1xf32, #tpu.memory_space<vmem>>, vector<16x1xf32>,
    return
  }
}

</mosaic_0001>

<llo_original>
// kernel: tpu_custom_call.1
$region0: #{tpu_custom_call.1}
  #allocation0 [shape = 'u32[]', space=smem, size = 0x4, offset = 0x4, fixed_abs, tag = 'smem constant byte address 0x4 - core index']
  #allocation1 [shape = 'u32[72,128]{1,0:T(1,128)}', space=vmem, size = 0x9000, scoped, tag = 'internal scratch']
  %s0 = inlined_call_operand.vmem [shape: f32[16,32], index: 0, kind: input, shape index: {}]
  %s1 = inlined_call_operand.vmem [shape: bf16[160,64], index: 1, kind: input, shape index: {}]
  %s2 = inlined_call_operand.vmem [shape: f32[8,64], index: 2, kind: input, shape index: {}]
  %s3 = inlined_call_operand.vmem [shape: f32[16,1], index: 3, kind: output, shape index: {}]
  %s4 = sld [smem:[#allocation0]]
  $region22: #{tpu_custom_call.1} parent=0
    _
  %s6 = ssub.s32 1, %s4
  %s7 = scalar_select 0, %s6, %s4
  // Predicated region
  $region2: #{tpu_custom_call.1} parent=0 // pred_check
    _
  $region3: #{tpu_custom_call.1} parent=0 // pred_check_branch
    %9 = sbr.rel (0) target = $region5
  $region4: #{tpu_custom_call.1} parent=0 // pred_region
    _
  $region5: #{tpu_custom_call.1} parent=0 // pred_fallthru
    _
  // Predicated region
  $region6: #{tpu_custom_call.1} parent=0 // pred_check
    _
  $region7: #{tpu_custom_call.1} parent=0 // pred_check_branch
    %11 = sbr.rel (0) target = $region9
  $region8: #{tpu_custom_call.1} parent=0 // pred_region
    _
  $region9: #{tpu_custom_call.1} parent=0 // pred_fallthru
    _
  // Predicated region
  $region10: #{tpu_custom_call.1} parent=0 // pred_check
    _
  $region11: #{tpu_custom_call.1} parent=0 // pred_check_branch
    %13 = sbr.rel (0) target = $region13
  $region12: #{tpu_custom_call.1} parent=0 // pred_region
    _
  $region13: #{tpu_custom_call.1} parent=0 // pred_fallthru
    _
  %v15 = vld [vmem:[%s0] sm:$0xff]
  %v16 = vld [vmem:[%s0 + $0x8] sm:$0xff]
  %v17 = vpack.c.bf16 %v16, %v15
  %v18 = vld [vmem:[%s2] sm:$0xff]
  %v19 = vld [vmem:[%s1] sm:$0xf]
  %v20 = vld [vmem:[%s1 + $0x4] sm:$0xf]
  %v21 = vld [vmem:[%s1 + $0x8] sm:$0xf]
  %v22 = vld [vmem:[%s1 + $0xc] sm:$0xf]
  %v23 = vld [vmem:[%s1 + $0x10] sm:$0xf]
  %v24 = vld [vmem:[%s1 + $0x14] sm:$0xf]
  %v25 = vld [vmem:[%s1 + $0x18] sm:$0xf]
  %v26 = vld [vmem:[%s1 + $0x1c] sm:$0xf]
  %v27 = vld [vmem:[%s1 + $0x20] sm:$0xf]
  %v28 = vld [vmem:[%s1 + $0x24] sm:$0xf]
  %v29 = vld [vmem:[%s1 + $0x28] sm:$0xf]
  %v30 = vld [vmem:[%s1 + $0x2c] sm:$0xf]
  %v31 = vld [vmem:[%s1 + $0x30] sm:$0xf]
  %v32 = vld [vmem:[%s1 + $0x34] sm:$0xf]
  %v33 = vld [vmem:[%s1 + $0x38] sm:$0xf]
  %v34 = vld [vmem:[%s1 + $0x3c] sm:$0xf]
  %v35 = vld [vmem:[%s1 + $0x40] sm:$0xf]
  %v36 = vld [vmem:[%s1 + $0x44] sm:$0xf]
  %v37 = vld [vmem:[%s1 + $0x48] sm:$0xf]
  %v38 = vld [vmem:[%s1 + $0x4c] sm:$0xf]
  %v39 = vperm.slane %v18, 0
  %v44 = vunpack.c.l.b16 %v19
  %v45 = vunpack.c.l.b16 %v20
  %v46 = vunpack.c.l.b16 %v21
  %v47 = vunpack.c.l.b16 %v22
  %v48 = vpack.c.b16 %v45, %v44
  %v49 = vpack.c.b16 %v47, %v46
  %vm52 = vcmask 261120
  %v54 = vsel %vm52, %v17, 0
  %56 = vmatpush.bf16.msra.mxu0 0
  %57 = vmatpush.bf16.msra.mxu0 0
  %58 = vmatpush.bf16.msra.mxu0 0
  %59 = vmatpush.bf16.msra.mxu0 0
  %60 = vmatpush.bf16.msra.mxu0 0
  %61 = vmatpush.bf16.msra.mxu0 0
  %62 = vmatpush.bf16.msra.mxu0 %v49
  %63 = vmatpush.bf16.msra.mxu0 %v48
  %64 = vmatmul.bf16.gmra.mxu0 %v54
  %v65 = vpop.f32.mrf.mxu0
  %v66 = vadd.f32 %v39, %v65
  %v67 = vpop.f32.mrf.mxu0
  %v68 = vadd.f32 %v39, %v67
  %69 = vdwg.mxu0
  %v70 = vmax.f32 %v66, 0.0
  %v71 = vmax.f32 %v68, 0.0
  %v72 = vpack.c.bf16 %v71, %v70
  %v73 = vperm.slane %v18, 1
  %v82 = vunpack.c.l.b16 %v23
  %v83 = vunpack.c.l.b16 %v24
  %v84 = vunpack.c.l.b16 %v25
  %v85 = vunpack.c.l.b16 %v26
  %v86 = vunpack.c.l.b16 %v27
  %v87 = vunpack.c.l.b16 %v28
  %v88 = vunpack.c.l.b16 %v29
  %v89 = vunpack.c.l.b16 %v30
  %v90 = vpack.c.b16 %v83, %v82
  %v91 = vpack.c.b16 %v85, %v84
  %v92 = vpack.c.b16 %v87, %v86
  %v93 = vpack.c.b16 %v89, %v88
  %vm98 = vcmask 523264
  %v100 = vsel %vm98, %v72, 0
  %102 = vmatpush.bf16.msra.mxu0 0
  %103 = vmatpush.bf16.msra.mxu0 0
  %104 = vmatpush.bf16.msra.mxu0 0
  %105 = vmatpush.bf16.msra.mxu0 0
  %106 = vmatpush.bf16.msra.mxu0 %v93
  %107 = vmatpush.bf16.msra.mxu0 %v92
  %108 = vmatpush.bf16.msra.mxu0 %v91
  %109 = vmatpush.bf16.msra.mxu0 %v90
  %110 = vmatmul.bf16.gmra.mxu0 %v100
  %v111 = vpop.f32.mrf.mxu0
  %v112 = vadd.f32 %v73, %v111
  %v113 = vpop.f32.mrf.mxu0
  %v114 = vadd.f32 %v73, %v113
  %115 = vdwg.mxu0
  %v116 = vmax.f32 %v112, 0.0
  %v117 = vmax.f32 %v114, 0.0
  %v118 = vpack.c.bf16 %v117, %v116
  %v119 = vperm.slane %v18, 2
  %v128 = vunpack.c.l.b16 %v31
  %v129 = vunpack.c.l.b16 %v32
  %v130 = vunpack.c.l.b16 %v33
  %v131 = vunpack.c.l.b16 %v34
  %v132 = vunpack.c.l.b16 %v35
  %v133 = vunpack.c.l.b16 %v36
  %v134 = vunpack.c.l.b16 %v37
  %v135 = vunpack.c.l.b16 %v38
  %v136 = vpack.c.b16 %v129, %v128
  %v137 = vpack.c.b16 %v131, %v130
  %v138 = vpack.c.b16 %v133, %v132
  %v139 = vpack.c.b16 %v135, %v134
  %v145 = vsel %vm98, %v118, 0
  %147 = vmatpush.bf16.msra.mxu0 0
  %148 = vmatpush.bf16.msra.mxu0 0
  %149 = vmatpush.bf16.msra.mxu0 0
  %150 = vmatpush.bf16.msra.mxu0 0
  %151 = vmatpush.bf16.msra.mxu0 %v139
  %152 = vmatpush.bf16.msra.mxu0 %v138
  %153 = vmatpush.bf16.msra.mxu0 %v137
  %154 = vmatpush.bf16.msra.mxu0 %v136
  %155 = vmatmul.bf16.gmra.mxu0 %v145
  %v156 = vpop.f32.mrf.mxu0
  %v157 = vadd.f32 %v119, %v156
  %v158 = vpop.f32.mrf.mxu0
  %v159 = vadd.f32 %v119, %v158
  %160 = vdwg.mxu0
  %v161 = vmax.f32 %v157, 0.0
  %v162 = vmax.f32 %v159, 0.0
  %v163 = vperm.slane %v18, 3
  %v164 = vmul.f32 %v161, %v163
  %v165 = vmul.f32 %v162, %v163
  %v166 = vsel %vm98, %v164, 0.0
  %167 = vadd.xlane.f32.xlu0 %v166
  %v168 = vpop.xlane.xlu0 %167
  %v169 = vsel %vm98, %v165, 0.0
  %170 = vadd.xlane.f32.xlu0 %v169
  %v171 = vpop.xlane.xlu0 %170
  %v172 = vperm.slane %v18, 4
  %v173 = vadd.f32 %v168, %v172
  %v174 = vadd.f32 %v171, %v172
  %vm175 = vcmask 7168
  %176 = vst.msk [vmem:[%s3] sm:$0xff] %vm175, %v173
  %177 = vst.msk [vmem:[%s3 + $0x8] sm:$0xff] %vm175, %v174
  // Predicated region
  $region14: #{tpu_custom_call.1} parent=0 // pred_check
    _
  $region15: #{tpu_custom_call.1} parent=0 // pred_check_branch
    %179 = sbr.rel (0) target = $region17
  $region16: #{tpu_custom_call.1} parent=0 // pred_region
    _
  $region17: #{tpu_custom_call.1} parent=0 // pred_fallthru
    _
  // Predicated region
  $region18: #{tpu_custom_call.1} parent=0 // pred_check
    _
  $region19: #{tpu_custom_call.1} parent=0 // pred_check_branch
    %181 = sbr.rel (0) target = $region21
  $region20: #{tpu_custom_call.1} parent=0 // pred_region
    _
  $region21: #{tpu_custom_call.1} parent=0 // pred_fallthru
    _

</llo_original>
